<compile_context>
chip_gen: v7x
topology: tpu7x:2x2x1
jax: 0.10.0
libtpu: 0.0.40
codegen_flags: <defaults>
</compile_context>

<pallas_src>
import functools

import jax
import jax.numpy as jnp
from jax.experimental import pallas as pl
from jax.experimental.pallas import tpu as pltpu


def _round_up(n, m):
    return ((n + m - 1) // m) * m


def _conv_stack_kernel(x_ref, y_ref, w1_ref, w2_ref, o_ref, h_ref,
                       *, C, Cp, Op, W, Wp, L, Lfull, bound):
    """One batch element per grid step.  Layout: channels x flat padded spatial.

    x_ref, y_ref : (1, C, Lfull)   bf16  zero-padded features, row stride Wp
    w1_ref       : (Cp, 9*2C)      bf16  conv1 weights, [c_out, tap*2C + c_in]
    w2_ref       : (Op, 9*Cp)      bf16  conv2 weights, [c_out, tap*Cp + c_in]
    o_ref        : (1, Op, L)      f32   flat conv2 output (pad columns kept)
    h_ref        : VMEM (Cp, Lfull) f32  conv1 activations restaged with halo
    """
    offs = tuple(dy * Wp + dx for dy in range(3) for dx in range(3))

    # ---- conv1 (2C -> C): one K = 9*2C matmul on lane-dense patches ---------
    # Patch rows are tap-major; per tap the x channels come first then the y
    # channels, i.e. exactly the cat(x, y) channel order the weights expect.
    pieces = []
    for o in offs:
        pieces.append(x_ref[0, :, o:o + L])          # (C, L) bf16
        pieces.append(y_ref[0, :, o:o + L])          # (C, L) bf16
    p1 = jnp.concatenate(pieces, axis=0)             # (9*2C, L) bf16
    h1 = jnp.dot(w1_ref[...], p1,
                 preferred_element_type=jnp.float32)  # (Cp, L) f32
    h1 = jnp.maximum(h1, 0.0)                         # ReLU on the f32 VPU path

    # Zero the junk columns (flat column >= W inside each padded-width row) so
    # they become conv2's zero padding after the halo shift below.
    col = jax.lax.broadcasted_iota(jnp.int32, (Cp, L), 1) % Wp
    h1 = jnp.where(col < W, h1, 0.0)

    # ---- restage with a zero halo: interior lives at lane offset Wp+1 -------
    # Only the small untouched strips are zeroed; the interior (including every
    # padding column/row that falls inside it) is fully rewritten each step.
    head = Wp + 1
    tail = Lfull - (head + L)
    h_ref[:, 0:head] = jnp.zeros((Cp, head), jnp.float32)
    h_ref[:, head:head + L] = h1
    h_ref[:, head + L:Lfull] = jnp.zeros((Cp, tail), jnp.float32)

    # ---- conv2 (C -> out_ch): one K = 9*Cp matmul ----------------------------
    p2 = jnp.concatenate([h_ref[:, o:o + L] for o in offs], axis=0)  # (9*Cp, L)
    out = jnp.dot(w2_ref[...], p2.astype(jnp.bfloat16),
                  preferred_element_type=jnp.float32)                # (Op, L)

    # ---- BoundFunction forward: clip to [-bound, bound] (f32 VPU) ------------
    o_ref[0] = jnp.clip(out, -bound, bound)


def decoder_conv_stack(x_feats, y_feats, w1, w2, bound):
    """x_feats, y_feats: (B, H, W, in_ch) NHWC dense features -> (B,H,W,out_ch)."""
    B, H, W, C = x_feats.shape
    out_ch = w2.shape[-1]
    assert w1.shape == (3, 3, 2 * C, C) and w2.shape == (3, 3, C, out_ch)

    # Flat-spatial geometry.  Wp >= W+2 gives the 3x3 halo; W=16 -> Wp=24 so
    # L = H*Wp = 384 = 3*128 (fully lane-dense).  One top pad row + two bottom
    # pad rows give every shifted slice room to stay in bounds.
    Wp = W + 8
    L = H * Wp
    Lfull = (H + 3) * Wp
    Cp = _round_up(C, 8)        # pad channel (sublane) dims to >= 8
    Op = _round_up(out_ch, 8)

    def to_flat(t):             # layout plumbing only: (B,H,W,C) -> (B,C,Lfull)
        t = jnp.transpose(t, (0, 3, 1, 2))                         # (B,C,H,W)
        t = jnp.pad(t, ((0, 0), (0, 0), (1, 2), (1, Wp - W - 1)))  # zero halo
        return t.reshape(B, C, Lfull).astype(jnp.bfloat16)

    xf, yf = to_flat(x_feats), to_flat(y_feats)

    # Weight matrices: [c_out, (dy*3+dx)*Cin + c_in], matching the patch rows.
    w1p = jnp.pad(w1, ((0, 0), (0, 0), (0, 0), (0, Cp - C)))
    w1m = w1p.reshape(9 * 2 * C, Cp).T.astype(jnp.bfloat16)         # (Cp, 9*2C)
    w2p = jnp.pad(w2, ((0, 0), (0, 0), (0, Cp - C), (0, Op - out_ch)))
    w2m = w2p.reshape(9 * Cp, Op).T.astype(jnp.bfloat16)            # (Op, 9*Cp)

    kernel = functools.partial(_conv_stack_kernel, C=C, Cp=Cp, Op=Op, W=W,
                               Wp=Wp, L=L, Lfull=Lfull, bound=float(bound))

    out_flat = pl.pallas_call(
        kernel,
        out_shape=jax.ShapeDtypeStruct((B, Op, L), jnp.float32),
        grid_spec=pltpu.PrefetchScalarGridSpec(
            num_scalar_prefetch=0,
            grid=(B,),
            in_specs=[
                pl.BlockSpec((1, C, Lfull), lambda b: (b, 0, 0)),
                pl.BlockSpec((1, C, Lfull), lambda b: (b, 0, 0)),
                pl.BlockSpec((Cp, 9 * 2 * C), lambda b: (0, 0)),
                pl.BlockSpec((Op, 9 * Cp), lambda b: (0, 0)),
            ],
            out_specs=pl.BlockSpec((1, Op, L), lambda b: (b, 0, 0)),
            scratch_shapes=[pltpu.VMEM((Cp, Lfull), jnp.float32)],
        ),
        compiler_params=pltpu.CompilerParams(
            dimension_semantics=("parallel",)),
    )(xf, yf, w1m, w2m)

    # Layout plumbing back to NHWC; drop padded channels and junk pad columns.
    out = out_flat[:, :out_ch, :].reshape(B, out_ch, H, Wp)[:, :, :, :W]
    return jnp.transpose(out, (0, 2, 3, 1)).astype(x_feats.dtype)


def _reference(x_feats, y_feats, w1, w2, bound):
    """Pure-JAX reference mirroring the kernel's bf16-operand / f32-accum path."""
    f32, bf16 = jnp.float32, jnp.bfloat16
    dn = ('NHWC', 'HWIO', 'NHWC')
    xc = jnp.concatenate([x_feats, y_feats], axis=-1).astype(bf16).astype(f32)
    h = jax.lax.conv_general_dilated(xc, w1.astype(bf16).astype(f32), (1, 1),
                                     'SAME', dimension_numbers=dn,
                                     precision=jax.lax.Precision.HIGHEST)
    h = jax.nn.relu(h).astype(bf16).astype(f32)
    o = jax.lax.conv_general_dilated(h, w2.astype(bf16).astype(f32), (1, 1),
                                     'SAME', dimension_numbers=dn,
                                     precision=jax.lax.Precision.HIGHEST)
    return jnp.clip(o, -bound, bound)


if __name__ == "__main__":
    # small shapes consistent with the module's conv blocks
    B, H, W = 2, 16, 16
    in_ch, out_ch = 4, 8
    bottleneck_value_bound = 2.0

    key = jax.random.PRNGKey(0)
    k_x, k_y, k_w1, k_w2 = jax.random.split(key, 4)

    x = jax.random.normal(k_x, (B, H, W, in_ch), jnp.float32)
    y = jax.random.normal(k_y, (B, H, W, in_ch), jnp.float32)
    # conv1: (3,3, in_ch+in_ch, in_ch)    conv2: (3,3, in_ch, out_ch)   (HWIO)
    w1 = 0.1 * jax.random.normal(k_w1, (3, 3, 2 * in_ch, in_ch), jnp.float32)
    w2 = 0.1 * jax.random.normal(k_w2, (3, 3, in_ch, out_ch), jnp.float32)

    out = jax.block_until_ready(
        decoder_conv_stack(x, y, w1, w2, bottleneck_value_bound))
    ref = _reference(x, y, w1, w2, bottleneck_value_bound)

    assert out.shape == (B, H, W, out_ch)
    max_diff = jnp.max(jnp.abs(out - ref))
    assert jnp.allclose(out, ref, atol=2e-2, rtol=2e-2), \
        f"max abs diff {max_diff}"

    print("KERNEL_OK")
</pallas_src>

<mosaic_0001>
module attributes {stable_mosaic.version = 11 : i64} {
  func.func @_conv_stack_kernel(%arg0: i32, %arg1: memref<1x4x456xbf16, #tpu.memory_space<vmem>>, %arg2: memref<1x4x456xbf16, #tpu.memory_space<vmem>>, %arg3: memref<8x72xbf16, #tpu.memory_space<vmem>>, %arg4: memref<8x72xbf16, #tpu.memory_space<vmem>>, %arg5: memref<1x8x384xf32, #tpu.memory_space<vmem>>, %arg6: memref<8x456xf32, #tpu.memory_space<vmem>>) attributes {dimension_semantics = [#tpu.dimension_semantics<parallel>], iteration_bounds = array<i64: 2>, scalar_prefetch = 0 : i64, scratch_operands = 1 : i64, tpu.core_type = #tpu.core_type<tc>, window_params = [{transform_indices = @transform_0, window_bounds = array<i64: 1, 4, 456>}, {transform_indices = @transform_1, window_bounds = array<i64: 1, 4, 456>}, {pipeline_mode = #tpu.pipeline_mode<synchronous>, transform_indices = @transform_2, window_bounds = array<i64: 8, 72>}, {pipeline_mode = #tpu.pipeline_mode<synchronous>, transform_indices = @transform_3, window_bounds = array<i64: 8, 72>}, {transform_indices = @transform_4, window_bounds = array<i64: 1, 8, 384>}]} {
    %c0 = arith.constant 0 : index
    %c0_0 = arith.constant 0 : index
    %c0_1 = arith.constant 0 : index
    %0 = vector.load %arg1[%c0, %c0_0, %c0_1] : memref<1x4x456xbf16, #tpu.memory_space<vmem>>, vector<1x4x384xbf16>
    %1 = vector.shape_cast %0 : vector<1x4x384xbf16> to vector<4x384xbf16>
    %c0_2 = arith.constant 0 : index
    %c0_3 = arith.constant 0 : index
    %c0_4 = arith.constant 0 : index
    %2 = vector.load %arg2[%c0_2, %c0_3, %c0_4] : memref<1x4x456xbf16, #tpu.memory_space<vmem>>, vector<1x4x384xbf16>
    %3 = vector.shape_cast %2 : vector<1x4x384xbf16> to vector<4x384xbf16>
    %c0_5 = arith.constant 0 : index
    %c0_6 = arith.constant 0 : index
    %c1 = arith.constant 1 : index
    %4 = vector.load %arg1[%c0_5, %c0_6, %c1] : memref<1x4x456xbf16, #tpu.memory_space<vmem>>, vector<1x4x384xbf16>
    %5 = vector.shape_cast %4 : vector<1x4x384xbf16> to vector<4x384xbf16>
    %c0_7 = arith.constant 0 : index
    %c0_8 = arith.constant 0 : index
    %c1_9 = arith.constant 1 : index
    %6 = vector.load %arg2[%c0_7, %c0_8, %c1_9] : memref<1x4x456xbf16, #tpu.memory_space<vmem>>, vector<1x4x384xbf16>
    %7 = vector.shape_cast %6 : vector<1x4x384xbf16> to vector<4x384xbf16>
    %c0_10 = arith.constant 0 : index
    %c0_11 = arith.constant 0 : index
    %c2 = arith.constant 2 : index
    %8 = vector.load %arg1[%c0_10, %c0_11, %c2] : memref<1x4x456xbf16, #tpu.memory_space<vmem>>, vector<1x4x384xbf16>
    %9 = vector.shape_cast %8 : vector<1x4x384xbf16> to vector<4x384xbf16>
    %c0_12 = arith.constant 0 : index
    %c0_13 = arith.constant 0 : index
    %c2_14 = arith.constant 2 : index
    %10 = vector.load %arg2[%c0_12, %c0_13, %c2_14] : memref<1x4x456xbf16, #tpu.memory_space<vmem>>, vector<1x4x384xbf16>
    %11 = vector.shape_cast %10 : vector<1x4x384xbf16> to vector<4x384xbf16>
    %c0_15 = arith.constant 0 : index
    %c0_16 = arith.constant 0 : index
    %c24 = arith.constant 24 : index
    %12 = vector.load %arg1[%c0_15, %c0_16, %c24] : memref<1x4x456xbf16, #tpu.memory_space<vmem>>, vector<1x4x384xbf16>
    %13 = vector.shape_cast %12 : vector<1x4x384xbf16> to vector<4x384xbf16>
    %c0_17 = arith.constant 0 : index
    %c0_18 = arith.constant 0 : index
    %c24_19 = arith.constant 24 : index
    %14 = vector.load %arg2[%c0_17, %c0_18, %c24_19] : memref<1x4x456xbf16, #tpu.memory_space<vmem>>, vector<1x4x384xbf16>
    %15 = vector.shape_cast %14 : vector<1x4x384xbf16> to vector<4x384xbf16>
    %c0_20 = arith.constant 0 : index
    %c0_21 = arith.constant 0 : index
    %c25 = arith.constant 25 : index
    %16 = vector.load %arg1[%c0_20, %c0_21, %c25] : memref<1x4x456xbf16, #tpu.memory_space<vmem>>, vector<1x4x384xbf16>
    %17 = vector.shape_cast %16 : vector<1x4x384xbf16> to vector<4x384xbf16>
    %c0_22 = arith.constant 0 : index
    %c0_23 = arith.constant 0 : index
    %c25_24 = arith.constant 25 : index
    %18 = vector.load %arg2[%c0_22, %c0_23, %c25_24] : memref<1x4x456xbf16, #tpu.memory_space<vmem>>, vector<1x4x384xbf16>
    %19 = vector.shape_cast %18 : vector<1x4x384xbf16> to vector<4x384xbf16>
    %c0_25 = arith.constant 0 : index
    %c0_26 = arith.constant 0 : index
    %c26 = arith.constant 26 : index
    %20 = vector.load %arg1[%c0_25, %c0_26, %c26] : memref<1x4x456xbf16, #tpu.memory_space<vmem>>, vector<1x4x384xbf16>
    %21 = vector.shape_cast %20 : vector<1x4x384xbf16> to vector<4x384xbf16>
    %c0_27 = arith.constant 0 : index
    %c0_28 = arith.constant 0 : index
    %c26_29 = arith.constant 26 : index
    %22 = vector.load %arg2[%c0_27, %c0_28, %c26_29] : memref<1x4x456xbf16, #tpu.memory_space<vmem>>, vector<1x4x384xbf16>
    %23 = vector.shape_cast %22 : vector<1x4x384xbf16> to vector<4x384xbf16>
    %c0_30 = arith.constant 0 : index
    %c0_31 = arith.constant 0 : index
    %c48 = arith.constant 48 : index
    %24 = vector.load %arg1[%c0_30, %c0_31, %c48] : memref<1x4x456xbf16, #tpu.memory_space<vmem>>, vector<1x4x384xbf16>
    %25 = vector.shape_cast %24 : vector<1x4x384xbf16> to vector<4x384xbf16>
    %c0_32 = arith.constant 0 : index
    %c0_33 = arith.constant 0 : index
    %c48_34 = arith.constant 48 : index
    %26 = vector.load %arg2[%c0_32, %c0_33, %c48_34] : memref<1x4x456xbf16, #tpu.memory_space<vmem>>, vector<1x4x384xbf16>
    %27 = vector.shape_cast %26 : vector<1x4x384xbf16> to vector<4x384xbf16>
    %c0_35 = arith.constant 0 : index
    %c0_36 = arith.constant 0 : index
    %c49 = arith.constant 49 : index
    %28 = vector.load %arg1[%c0_35, %c0_36, %c49] : memref<1x4x456xbf16, #tpu.memory_space<vmem>>, vector<1x4x384xbf16>
    %29 = vector.shape_cast %28 : vector<1x4x384xbf16> to vector<4x384xbf16>
    %c0_37 = arith.constant 0 : index
    %c0_38 = arith.constant 0 : index
    %c49_39 = arith.constant 49 : index
    %30 = vector.load %arg2[%c0_37, %c0_38, %c49_39] : memref<1x4x456xbf16, #tpu.memory_space<vmem>>, vector<1x4x384xbf16>
    %31 = vector.shape_cast %30 : vector<1x4x384xbf16> to vector<4x384xbf16>
    %c0_40 = arith.constant 0 : index
    %c0_41 = arith.constant 0 : index
    %c50 = arith.constant 50 : index
    %32 = vector.load %arg1[%c0_40, %c0_41, %c50] : memref<1x4x456xbf16, #tpu.memory_space<vmem>>, vector<1x4x384xbf16>
    %33 = vector.shape_cast %32 : vector<1x4x384xbf16> to vector<4x384xbf16>
    %c0_42 = arith.constant 0 : index
    %c0_43 = arith.constant 0 : index
    %c50_44 = arith.constant 50 : index
    %34 = vector.load %arg2[%c0_42, %c0_43, %c50_44] : memref<1x4x456xbf16, #tpu.memory_space<vmem>>, vector<1x4x384xbf16>
    %35 = vector.shape_cast %34 : vector<1x4x384xbf16> to vector<4x384xbf16>
    %36 = tpu.concatenate %1, %3, %5, %7, %9, %11, %13, %15, %17, %19, %21, %23, %25, %27, %29, %31 in 0 : vector<4x384xbf16>, vector<4x384xbf16>, vector<4x384xbf16>, vector<4x384xbf16>, vector<4x384xbf16>, vector<4x384xbf16>, vector<4x384xbf16>, vector<4x384xbf16>, vector<4x384xbf16>, vector<4x384xbf16>, vector<4x384xbf16>, vector<4x384xbf16>, vector<4x384xbf16>, vector<4x384xbf16>, vector<4x384xbf16>, vector<4x384xbf16> -> vector<64x384xbf16>
    %37 = tpu.concatenate %33, %35 in 0 : vector<4x384xbf16>, vector<4x384xbf16> -> vector<8x384xbf16>
    %38 = tpu.concatenate %36, %37 in 0 : vector<64x384xbf16>, vector<8x384xbf16> -> vector<72x384xbf16>
    %c0_45 = arith.constant 0 : index
    %c0_46 = arith.constant 0 : index
    %39 = vector.load %arg3[%c0_45, %c0_46] : memref<8x72xbf16, #tpu.memory_space<vmem>>, vector<8x72xbf16>
    %cst = arith.constant dense<0.000000e+00> : vector<8x384xf32>
    %40 = tpu.matmul %39, %38, %cst {dimension_numbers = #tpu.dot_dimension_numbers<[1], [0], [0], [1], [0, 0, 1, 1], [], []>} : vector<8x72xbf16>, vector<72x384xbf16>, vector<8x384xf32> -> vector<8x384xf32>
    %cst_47 = arith.constant 0.000000e+00 : f32
    %41 = vector.broadcast %cst_47 : f32 to vector<8x384xf32>
    %42 = arith.maximumf %40, %41 : vector<8x384xf32>
    %43 = tpu.iota {dimensions = array<i32: 1>} : vector<8x384xi32>
    %c24_i32 = arith.constant 24 : i32
    %c0_i32 = arith.constant 0 : i32
    %44 = arith.cmpi eq, %c24_i32, %c0_i32 : i32
    %c1_i32 = arith.constant 1 : i32
    %45 = arith.select %44, %c1_i32, %c24_i32 : i32
    %46 = vector.broadcast %45 : i32 to vector<8x384xi32>
    %47 = arith.remsi %43, %46 : vector<8x384xi32>
    %c0_i32_48 = arith.constant 0 : i32
    %48 = vector.broadcast %c0_i32_48 : i32 to vector<8x384xi32>
    %49 = arith.cmpi ne, %47, %48 : vector<8x384xi32>
    %c0_i32_49 = arith.constant 0 : i32
    %50 = vector.broadcast %c0_i32_49 : i32 to vector<8x384xi32>
    %51 = arith.cmpi slt, %47, %50 : vector<8x384xi32>
    %c0_i32_50 = arith.constant 0 : i32
    %52 = arith.cmpi slt, %45, %c0_i32_50 : i32
    %53 = vector.broadcast %52 : i1 to vector<8x384xi1>
    %54 = vector.broadcast %53 : vector<8x384xi1> to vector<8x384xi1>
    %55 = arith.xori %51, %54 : vector<8x384xi1>
    %56 = arith.andi %55, %49 : vector<8x384xi1>
    %57 = vector.broadcast %45 : i32 to vector<8x384xi32>
    %58 = arith.addi %47, %57 : vector<8x384xi32>
    %59 = arith.select %56, %58, %47 : vector<8x384xi1>, vector<8x384xi32>
    %c16_i32 = arith.constant 16 : i32
    %60 = vector.broadcast %c16_i32 : i32 to vector<8x384xi32>
    %61 = arith.cmpi slt, %59, %60 : vector<8x384xi32>
    %cst_51 = arith.constant 0.000000e+00 : f32
    %62 = vector.broadcast %cst_51 : f32 to vector<8x384xf32>
    %63 = arith.select %61, %42, %62 : vector<8x384xi1>, vector<8x384xf32>
    %cst_52 = arith.constant 0.000000e+00 : f32
    %64 = vector.broadcast %cst_52 : f32 to vector<8x25xf32>
    %c0_53 = arith.constant 0 : index
    %c0_54 = arith.constant 0 : index
    %65 = vector.load %arg6[%c0_53, %c0_54] : memref<8x456xf32, #tpu.memory_space<vmem>>, vector<8x25xf32>
    tpu.vector_store %arg6[%c0_53, %c0_54], %64 {strides = array<i32>} : memref<8x456xf32, #tpu.memory_space<vmem>>, vector<8x25xf32>,
    %c0_55 = arith.constant 0 : index
    %c25_56 = arith.constant 25 : index
    %66 = vector.load %arg6[%c0_55, %c25_56] : memref<8x456xf32, #tpu.memory_space<vmem>>, vector<8x384xf32>
    tpu.vector_store %arg6[%c0_55, %c25_56], %63 {strides = array<i32>} : memref<8x456xf32, #tpu.memory_space<vmem>>, vector<8x384xf32>,
    %cst_57 = arith.constant 0.000000e+00 : f32
    %67 = vector.broadcast %cst_57 : f32 to vector<8x47xf32>
    %c0_58 = arith.constant 0 : index
    %c409 = arith.constant 409 : index
    %68 = vector.load %arg6[%c0_58, %c409] : memref<8x456xf32, #tpu.memory_space<vmem>>, vector<8x47xf32>
    tpu.vector_store %arg6[%c0_58, %c409], %67 {strides = array<i32>} : memref<8x456xf32, #tpu.memory_space<vmem>>, vector<8x47xf32>,
    %c0_59 = arith.constant 0 : index
    %c0_60 = arith.constant 0 : index
    %69 = vector.load %arg6[%c0_59, %c0_60] : memref<8x456xf32, #tpu.memory_space<vmem>>, vector<8x384xf32>
    %c0_61 = arith.constant 0 : index
    %c1_62 = arith.constant 1 : index
    %70 = vector.load %arg6[%c0_61, %c1_62] : memref<8x456xf32, #tpu.memory_space<vmem>>, vector<8x384xf32>
    %c0_63 = arith.constant 0 : index
    %c2_64 = arith.constant 2 : index
    %71 = vector.load %arg6[%c0_63, %c2_64] : memref<8x456xf32, #tpu.memory_space<vmem>>, vector<8x384xf32>
    %c0_65 = arith.constant 0 : index
    %c24_66 = arith.constant 24 : index
    %72 = vector.load %arg6[%c0_65, %c24_66] : memref<8x456xf32, #tpu.memory_space<vmem>>, vector<8x384xf32>
    %c0_67 = arith.constant 0 : index
    %c25_68 = arith.constant 25 : index
    %73 = vector.load %arg6[%c0_67, %c25_68] : memref<8x456xf32, #tpu.memory_space<vmem>>, vector<8x384xf32>
    %c0_69 = arith.constant 0 : index
    %c26_70 = arith.constant 26 : index
    %74 = vector.load %arg6[%c0_69, %c26_70] : memref<8x456xf32, #tpu.memory_space<vmem>>, vector<8x384xf32>
    %c0_71 = arith.constant 0 : index
    %c48_72 = arith.constant 48 : index
    %75 = vector.load %arg6[%c0_71, %c48_72] : memref<8x456xf32, #tpu.memory_space<vmem>>, vector<8x384xf32>
    %c0_73 = arith.constant 0 : index
    %c49_74 = arith.constant 49 : index
    %76 = vector.load %arg6[%c0_73, %c49_74] : memref<8x456xf32, #tpu.memory_space<vmem>>, vector<8x384xf32>
    %c0_75 = arith.constant 0 : index
    %c50_76 = arith.constant 50 : index
    %77 = vector.load %arg6[%c0_75, %c50_76] : memref<8x456xf32, #tpu.memory_space<vmem>>, vector<8x384xf32>
    %78 = tpu.concatenate %69, %70, %71, %72, %73, %74, %75, %76, %77 in 0 : vector<8x384xf32>, vector<8x384xf32>, vector<8x384xf32>, vector<8x384xf32>, vector<8x384xf32>, vector<8x384xf32>, vector<8x384xf32>, vector<8x384xf32>, vector<8x384xf32> -> vector<72x384xf32>
    %c0_77 = arith.constant 0 : index
    %c0_78 = arith.constant 0 : index
    %79 = vector.load %arg4[%c0_77, %c0_78] : memref<8x72xbf16, #tpu.memory_space<vmem>>, vector<8x72xbf16>
    %80 = arith.truncf %78 : vector<72x384xf32> to vector<72x384xbf16>
    %cst_79 = arith.constant dense<0.000000e+00> : vector<8x384xf32>
    %81 = tpu.matmul %79, %80, %cst_79 {dimension_numbers = #tpu.dot_dimension_numbers<[1], [0], [0], [1], [0, 0, 1, 1], [], []>} : vector<8x72xbf16>, vector<72x384xbf16>, vector<8x384xf32> -> vector<8x384xf32>
    %cst_80 = arith.constant -2.000000e+00 : f32
    %cst_81 = arith.constant 2.000000e+00 : f32
    %82 = vector.broadcast %cst_80 : f32 to vector<8x384xf32>
    %83 = arith.maximumf %82, %81 : vector<8x384xf32>
    %84 = vector.broadcast %cst_81 : f32 to vector<8x384xf32>
    %85 = arith.minimumf %84, %83 : vector<8x384xf32>
    %c0_82 = arith.constant 0 : index
    %c0_83 = arith.constant 0 : index
    %c0_84 = arith.constant 0 : index
    %86 = vector.load %arg5[%c0_82, %c0_83, %c0_84] : memref<1x8x384xf32, #tpu.memory_space<vmem>>, vector<1x8x384xf32>
    %87 = vector.shape_cast %86 : vector<1x8x384xf32> to vector<8x384xf32>
    %88 = vector.shape_cast %85 : vector<8x384xf32> to vector<1x8x384xf32>
    tpu.vector_store %arg5[%c0_82, %c0_83, %c0_84], %88 {strides = array<i32>} : memref<1x8x384xf32, #tpu.memory_space<vmem>>, vector<1x8x384xf32>,
    return
  }
  func.func @transform_0(%arg0: i32) -> (i32, i32, i32) {
    %c0_i32 = arith.constant 0 : i32
    %c0_i32_0 = arith.constant 0 : i32
    %c0_i32_1 = arith.constant 0 : i32
    return %arg0, %c0_i32, %c0_i32_0 : i32, i32, i32
  }
  func.func @transform_1(%arg0: i32) -> (i32, i32, i32) {
    %c0_i32 = arith.constant 0 : i32
    %c0_i32_0 = arith.constant 0 : i32
    %c0_i32_1 = arith.constant 0 : i32
    return %arg0, %c0_i32, %c0_i32_0 : i32, i32, i32
  }
  func.func @transform_2(%arg0: i32) -> (i32, i32) {
    %c0_i32 = arith.constant 0 : i32
    %c0_i32_0 = arith.constant 0 : i32
    %c0_i32_1 = arith.constant 0 : i32
    return %c0_i32, %c0_i32_0 : i32, i32
  }
  func.func @transform_3(%arg0: i32) -> (i32, i32) {
    %c0_i32 = arith.constant 0 : i32
    %c0_i32_0 = arith.constant 0 : i32
    %c0_i32_1 = arith.constant 0 : i32
    return %c0_i32, %c0_i32_0 : i32, i32
  }
  func.func @transform_4(%arg0: i32) -> (i32, i32, i32) {
    %c0_i32 = arith.constant 0 : i32
    %c0_i32_0 = arith.constant 0 : i32
    %c0_i32_1 = arith.constant 0 : i32
    return %arg0, %c0_i32, %c0_i32_0 : i32, i32, i32
  }
}

</mosaic_0001>

<llo_original>
// kernel: tpu_custom_call.1
$region0: #{tpu_custom_call.1}
  #allocation0 [shape = 'u32[]', space=smem, size = 0x4, offset = 0x4, fixed_abs, tag = 'smem constant byte address 0x4 - core index']
  #allocation1 [shape = 'u32[144,128]{1,0:T(1,128)}', space=vmem, size = 0x12000, scoped, tag = 'internal scratch']
  #allocation2 [shape = 'f32[8,456]{1,0:T(8,128)}', space=vmem, size = 0x4000, scoped, tag = 'scratch operand']
  %s0 = inlined_call_operand.hbm [shape: bf16[2,4,456], index: 0, kind: input, shape index: {}]
  %s1 = inlined_call_operand.hbm [shape: bf16[2,4,456], index: 1, kind: input, shape index: {}]
  %s2 = inlined_call_operand.vmem [shape: bf16[8,72], index: 2, kind: input, shape index: {}]
  %s3 = inlined_call_operand.vmem [shape: bf16[8,72], index: 3, kind: input, shape index: {}]
  %s4 = inlined_call_operand.hbm [shape: f32[2,8,384], index: 4, kind: output, shape index: {}]
  %s5 = sld [smem:[#allocation0]]
  $region57: #{tpu_custom_call.1} parent=0
    _
  %s7 = ssub.s32 1, %s5
  %s8 = scalar_select 0, %s7, %s5
  $region1: #{tpu_custom_call.1} parent=0
    #allocation3 [shape = 'u8[8192]{0}', space=vmem, size = 0x2000, scoped, tag = 'input window, operand 0']
    #allocation4 [shape = 's32[2]{0}', space=sflag, size = 0x8, scoped, tag = 'scoped memory for tpu_custom_call.1']
    #allocation5 [shape = 's32[2]{0}', space=sflag, size = 0x8, scoped, tag = 'scoped memory for tpu_custom_call.1']
    #allocation6 [shape = 'u8[8192]{0}', space=vmem, size = 0x2000, scoped, tag = 'input window, operand 1']
    #allocation7 [shape = 's32[2]{0}', space=sflag, size = 0x8, scoped, tag = 'scoped memory for tpu_custom_call.1']
    #allocation8 [shape = 'u8[24576]{0}', space=vmem, size = 0x6000, scoped, tag = 'output window, operand 0']
    %9 = vsyncpa [#allocation4], 0
    %s10 = scalar_lea.sflag [#allocation4], 1
    %11 = vsyncpa %s10, 0
    %12 = vsyncpa [#allocation7], 0
    %s13 = scalar_lea.sflag [#allocation7], 1
    %14 = vsyncpa %s13, 0
    %15 = vsyncpa [#allocation5], 0
    %s16 = scalar_lea.sflag [#allocation5], 1
    %17 = vsyncpa %s16, 0
    loop: start=0, step=1, limit=4
    $region2: #{tpu_custom_call.1} parent=1 // loop_pre_header
      _
    $region3: #{tpu_custom_call.1} parent=1 // loop_header
      %s19 = sphi 0, %s23
      %p20 = scmp.ge.s32.totalorder %s19, 4
      %s29 = sphi 0, %s31
      %s32 = sphi 0, %s29
      %s33 = sphi 0, %s32
      %s49 = sphi 0, %s33
      %s55 = sphi 0, %s57
      %s58 = sphi 0, %s55
      %s59 = sphi 0, %s58
      %s75 = sphi 0, %s59
      %s79 = sphi 0, %s79
      %s81 = sphi 0, %s79
      %s82 = sphi 0, %s81
      %s96 = sphi 0, %s82
      %s100 = sphi 0, %s100
      %s102 = sphi 0, %s100
      %s103 = sphi 0, %s102
      %s117 = sphi 0, %s103
      %s123 = sphi 0, %s125
      %s126 = sphi 0, %s123
      %s127 = sphi 0, %s126
      %s143 = sphi 0, %s127
    $region4: #{tpu_custom_call.1} parent=1 // loop_header_branch
      %22 = sbr.rel (%p20) target = $region8
    $region5: #{tpu_custom_call.1} parent=1 // loop_body
      %s24 = ssub.s32 %s19, 1
      %s25 = ssub.s32 %s19, 2
      %s26 = sadd.s32 %s19, 1
      %s27 = ssub.s32 %s19, %s26
      %p28 = scmp.eq.s32.totalorder %s27, 0
      %s30 = sadd.s32 %s29, 1
      %s31 = scalar_select %p28, %s29, %s30
      %p34 = pneg %p28
      %p35 = scmp.eq.s32.totalorder %s19, 1
      %p36 = por %p34, %p35
      %p37 = scmp.ne.s32.totalorder %s29, %s32
      %p38 = scmp.eq.s32.totalorder %s19, 0
      %p39 = por %p37, %p38
      %p40 = scmp.ne.s32.totalorder %s29, %s32
      %p41 = scmp.eq.s32.totalorder %s24, 1
      %p42 = por %p40, %p41
      %p43 = scmp.ne.s32.totalorder %s32, %s33
      %p44 = scmp.eq.s32.totalorder %s24, 0
      %p45 = por %p43, %p44
      %p46 = scmp.ne.s32.totalorder %s32, %s33
      %p47 = scmp.eq.s32.totalorder %s25, 1
      %p48 = por %p46, %p47
      %p50 = scmp.ne.s32.totalorder %s33, %s49
      %p51 = scmp.eq.s32.totalorder %s25, 0
      %p52 = por %p50, %p51
      %s53 = ssub.s32 %s19, %s26
      %p54 = scmp.eq.s32.totalorder %s53, 0
      %s56 = sadd.s32 %s55, 1
      %s57 = scalar_select %p54, %s55, %s56
      %p60 = pneg %p54
      %p61 = scmp.eq.s32.totalorder %s19, 1
      %p62 = por %p60, %p61
      %p63 = scmp.ne.s32.totalorder %s55, %s58
      %p64 = scmp.eq.s32.totalorder %s19, 0
      %p65 = por %p63, %p64
      %p66 = scmp.ne.s32.totalorder %s55, %s58
      %p67 = scmp.eq.s32.totalorder %s24, 1
      %p68 = por %p66, %p67
      %p69 = scmp.ne.s32.totalorder %s58, %s59
      %p70 = scmp.eq.s32.totalorder %s24, 0
      %p71 = por %p69, %p70
      %p72 = scmp.ne.s32.totalorder %s58, %s59
      %p73 = scmp.eq.s32.totalorder %s25, 1
      %p74 = por %p72, %p73
      %p76 = scmp.ne.s32.totalorder %s59, %s75
      %p77 = scmp.eq.s32.totalorder %s25, 0
      %p78 = por %p76, %p77
      %s80 = sadd.s32 %s79, 1
      %p83 = scmp.eq.s32.totalorder %s19, 1
      %p84 = scmp.ne.s32.totalorder %s79, %s81
      %p85 = scmp.eq.s32.totalorder %s19, 0
      %p86 = por %p84, %p85
      %p87 = scmp.ne.s32.totalorder %s79, %s81
      %p88 = scmp.eq.s32.totalorder %s24, 1
      %p89 = por %p87, %p88
      %p90 = scmp.ne.s32.totalorder %s81, %s82
      %p91 = scmp.eq.s32.totalorder %s24, 0
      %p92 = por %p90, %p91
      %p93 = scmp.ne.s32.totalorder %s81, %s82
      %p94 = scmp.eq.s32.totalorder %s25, 1
      %p95 = por %p93, %p94
      %p97 = scmp.ne.s32.totalorder %s82, %s96
      %p98 = scmp.eq.s32.totalorder %s25, 0
      %p99 = por %p97, %p98
      %s101 = sadd.s32 %s100, 1
      %p104 = scmp.eq.s32.totalorder %s19, 1
      %p105 = scmp.ne.s32.totalorder %s100, %s102
      %p106 = scmp.eq.s32.totalorder %s19, 0
      %p107 = por %p105, %p106
      %p108 = scmp.ne.s32.totalorder %s100, %s102
      %p109 = scmp.eq.s32.totalorder %s24, 1
      %p110 = por %p108, %p109
      %p111 = scmp.ne.s32.totalorder %s102, %s103
      %p112 = scmp.eq.s32.totalorder %s24, 0
      %p113 = por %p111, %p112
      %p114 = scmp.ne.s32.totalorder %s102, %s103
      %p115 = scmp.eq.s32.totalorder %s25, 1
      %p116 = por %p114, %p115
      %p118 = scmp.ne.s32.totalorder %s103, %s117
      %p119 = scmp.eq.s32.totalorder %s25, 0
      %p120 = por %p118, %p119
      %s121 = ssub.s32 %s19, %s26
      %p122 = scmp.eq.s32.totalorder %s121, 0
      %s124 = sadd.s32 %s123, 1
      %s125 = scalar_select %p122, %s123, %s124
      %p128 = pneg %p122
      %p129 = scmp.eq.s32.totalorder %s19, 1
      %p130 = por %p128, %p129
      %p131 = scmp.ne.s32.totalorder %s123, %s126
      %p132 = scmp.eq.s32.totalorder %s19, 0
      %p133 = por %p131, %p132
      %p134 = scmp.ne.s32.totalorder %s123, %s126
      %p135 = scmp.eq.s32.totalorder %s24, 1
      %p136 = por %p134, %p135
      %p137 = scmp.ne.s32.totalorder %s126, %s127
      %p138 = scmp.eq.s32.totalorder %s24, 0
      %p139 = por %p137, %p138
      %p140 = scmp.ne.s32.totalorder %s126, %s127
      %p141 = scmp.eq.s32.totalorder %s25, 1
      %p142 = por %p140, %p141
      %p144 = scmp.ne.s32.totalorder %s127, %s143
      %p145 = scmp.eq.s32.totalorder %s25, 0
      %p146 = por %p144, %p145
      %p147 = scmp.le.s32.totalorder 1, %s19
      %p148 = scmp.lt.s32.totalorder %s19, 3
      %p149 = pnand %p147, %p148
      %p150 = pneg %p149
      // Predicated region
      $region9: #{tpu_custom_call.1} parent=5 // pred_check
        _
      $region10: #{tpu_custom_call.1} parent=5 // pred_check_branch
        %152 = sbr.rel (%p149) target = $region12
      $region11: #{tpu_custom_call.1} parent=5 // pred_region
        %s153 = ssub.s32 %s19, 1
        // Predicated region
        $region13: #{tpu_custom_call.1} parent=11 // pred_check
          %p154 = pneg %p92
        $region14: #{tpu_custom_call.1} parent=11 // pred_check_branch
          %156 = sbr.rel (%p154) target = $region16
        $region15: #{tpu_custom_call.1} parent=11 // pred_region
          _
        $region16: #{tpu_custom_call.1} parent=11 // pred_fallthru
          _
        // Predicated region
        $region17: #{tpu_custom_call.1} parent=11 // pred_check
          %p157 = pneg %p113
        $region18: #{tpu_custom_call.1} parent=11 // pred_check_branch
          %159 = sbr.rel (%p157) target = $region20
        $region19: #{tpu_custom_call.1} parent=11 // pred_region
          _
        $region20: #{tpu_custom_call.1} parent=11 // pred_fallthru
          _
      $region12: #{tpu_custom_call.1} parent=5 // pred_fallthru
        _
      %p160 = scmp.lt.s32.totalorder %s19, 2
      // Predicated region
      $region21: #{tpu_custom_call.1} parent=5 // pred_check
        %p161 = pneg %p160
      $region22: #{tpu_custom_call.1} parent=5 // pred_check_branch
        %163 = sbr.rel (%p161) target = $region24
      $region23: #{tpu_custom_call.1} parent=5 // pred_region
        // Predicated region
        $region25: #{tpu_custom_call.1} parent=23 // pred_check
          %p164 = pneg %p39
        $region26: #{tpu_custom_call.1} parent=23 // pred_check_branch
          %166 = sbr.rel (%p164) target = $region28
        $region27: #{tpu_custom_call.1} parent=23 // pred_region
          %s167 = sand.u32 %s29, 1
          %s168 = scalar_lea.sflag [#allocation4], %s167
          %s169 = sand.u32 %s29, 1
          %s170 = smul.addr %s169, 8
          %s171 = scalar_lea.vmem [#allocation3], %s170
          %s173 = ssub.s32 128, 128
          %174 = vsyncadd %s168, %s173
          %s175 = smul.addr %s19, 4
          %s176 = smul.addr %s175, 32
          %s177 = scalar_lea.hbm %s0, %s176
          %s179 = sshll.u32 %s171, 4
          %s180 = int_to_ptr.vmem [resolvable:$true] %s179
          %182 = dma.hbm_to_vmem [thread:$0]  %s177, 128, %s180, %s168
        $region28: #{tpu_custom_call.1} parent=23 // pred_fallthru
          _
        // Predicated region
        $region29: #{tpu_custom_call.1} parent=23 // pred_check
          %p183 = pneg %p65
        $region30: #{tpu_custom_call.1} parent=23 // pred_check_branch
          %185 = sbr.rel (%p183) target = $region32
        $region31: #{tpu_custom_call.1} parent=23 // pred_region
          %s186 = sand.u32 %s55, 1
          %s187 = scalar_lea.sflag [#allocation7], %s186
          %s188 = sand.u32 %s55, 1
          %s189 = smul.addr %s188, 8
          %s190 = scalar_lea.vmem [#allocation6], %s189
          %s192 = ssub.s32 128, 128
          %193 = vsyncadd %s187, %s192
          %s194 = smul.addr %s19, 4
          %s195 = smul.addr %s194, 32
          %s196 = scalar_lea.hbm %s1, %s195
          %s198 = sshll.u32 %s190, 4
          %s199 = int_to_ptr.vmem [resolvable:$true] %s198
          %201 = dma.hbm_to_vmem [thread:$0]  %s196, 128, %s199, %s187
        $region32: #{tpu_custom_call.1} parent=23 // pred_fallthru
          _
      $region24: #{tpu_custom_call.1} parent=5 // pred_fallthru
        _
      %p202 = scmp.le.s32.totalorder 1, %s19
      %p203 = scmp.lt.s32.totalorder %s19, 3
      %p204 = pnand %p202, %p203
      %p205 = pneg %p204
      // Predicated region
      $region33: #{tpu_custom_call.1} parent=5 // pred_check
        _
      $region34: #{tpu_custom_call.1} parent=5 // pred_check_branch
        %207 = sbr.rel (%p204) target = $region36
      $region35: #{tpu_custom_call.1} parent=5 // pred_region
        %s208 = ssub.s32 %s19, 1
        %s209 = sand.u32 %s32, 1
        %s210 = scalar_lea.sflag [#allocation4], %s209
        %s211 = sand.u32 %s32, 1
        %s212 = smul.addr %s211, 8
        %s213 = scalar_lea.vmem [#allocation3], %s212
        // Predicated region
        $region37: #{tpu_custom_call.1} parent=35 // pred_check
          %p214 = pneg %p45
        $region38: #{tpu_custom_call.1} parent=35 // pred_check_branch
          %216 = sbr.rel (%p214) target = $region40
        $region39: #{tpu_custom_call.1} parent=35 // pred_region
          %217 = dma.done %s210, 128
        $region40: #{tpu_custom_call.1} parent=35 // pred_fallthru
          _
        %s218 = sand.u32 %s58, 1
        %s219 = scalar_lea.sflag [#allocation7], %s218
        %s220 = sand.u32 %s58, 1
        %s221 = smul.addr %s220, 8
        %s222 = scalar_lea.vmem [#allocation6], %s221
        // Predicated region
        $region41: #{tpu_custom_call.1} parent=35 // pred_check
          %p223 = pneg %p71
        $region42: #{tpu_custom_call.1} parent=35 // pred_check_branch
          %225 = sbr.rel (%p223) target = $region44
        $region43: #{tpu_custom_call.1} parent=35 // pred_region
          %226 = dma.done %s219, 128
        $region44: #{tpu_custom_call.1} parent=35 // pred_fallthru
          _
        %s227 = sand.u32 %s32, 1
        %s228 = scalar_lea.sflag [#allocation4], %s227
        %s229 = sand.u32 %s32, 1
        %s230 = smul.addr %s229, 8
        %s231 = scalar_lea.vmem [#allocation3], %s230
        %p232 = pneg %p45
        %p233 = pneg %p42
        %s234 = sand.u32 %s58, 1
        %s235 = scalar_lea.sflag [#allocation7], %s234
        %s236 = sand.u32 %s58, 1
        %s237 = smul.addr %s236, 8
        %s238 = scalar_lea.vmem [#allocation6], %s237
        %p239 = pneg %p71
        %p240 = pneg %p68
        %p241 = pneg %p92
        %p242 = pneg %p89
        %p243 = pneg %p113
        %p244 = pneg %p110
        %p245 = pneg %p139
        %p246 = pneg %p136
        %s247 = sand.u32 %s126, 1
        %s248 = scalar_lea.sflag [#allocation5], %s247
        %s249 = sand.u32 %s126, 1
        %s250 = smul.addr %s249, 24
        %s251 = scalar_lea.vmem [#allocation8], %s250
        %v253 = vld [vmem:[%s213] sm:$0x3f]
        %v254 = vld [vmem:[%s222] sm:$0x3f]
        %v255 = vld [vmem:[%s213] sm:$0xff]
        %v256 = vld [vmem:[%s222] sm:$0xff]
        %v258 = vcombine.high %v253, %v253
        %v260 = vunpack.c.l.s4 1983009808
        %v261 = vunpack.c.0.s8 %v260
        %v262 = vlaneseq
        %v263 = vshrl.u32 %v262, 7
        %v264 = vsub.s32 %v261, %v263
        %v265 = vrot.slane %v253, %v264
        %v267 = vunpack.c.l.s4 1983009808
        %v268 = vunpack.c.0.s8 %v267
        %v269 = vlaneseq
        %v270 = vshrl.u32 %v269, 7
        %v271 = vsub.s32 %v268, %v270
        %v272 = vrot.slane %v258, %v271
        %v273 = vcombine.high %v265, %v265
        %v275 = vcombine.low %v254, %v254
        %v277 = vunpack.c.l.s4 1983009808
        %v278 = vunpack.c.0.s8 %v277
        %v279 = vlaneseq
        %v280 = vshrl.u32 %v279, 7
        %v281 = vsub.s32 %v278, %v280
        %v282 = vrot.slane %v275, %v281
        %v284 = vunpack.c.l.s4 1983009808
        %v285 = vunpack.c.0.s8 %v284
        %v286 = vlaneseq
        %v287 = vshrl.u32 %v286, 7
        %v288 = vsub.s32 %v285, %v287
        %v289 = vrot.slane %v254, %v288
        %v290 = vcombine.high %v282, %v282
        %v292 = vcombine.high %v255, %v255
        %v294 = vunpack.c.l.s4 1983009808
        %v295 = vunpack.c.0.s8 %v294
        %v296 = vlaneseq
        %v297 = vshrl.u32 %v296, 7
        %v298 = vsub.s32 %v295, %v297
        %v299 = vrot.slane %v255, %v298
        %v301 = vunpack.c.l.s4 1983009808
        %v302 = vunpack.c.0.s8 %v301
        %v303 = vlaneseq
        %v304 = vshrl.u32 %v303, 7
        %v305 = vsub.s32 %v302, %v304
        %v306 = vrot.slane %v292, %v305
        %v307 = vcombine.low %v299, %v299
        %v308 = vcombine.low %v306, %v306
        %309 = vrot.lane.b32.xlu0 %v307, 127
        %v310 = vpop.permute.xlu0 %309
        %311 = vrot.lane.b32.xlu0 %v299, 127
        %v312 = vpop.permute.xlu0 %311
        %313 = vrot.lane.b32.xlu0 %v308, 127
        %v314 = vpop.permute.xlu0 %313
        %315 = vrot.lane.b32.xlu0 %v306, 127
        %v316 = vpop.permute.xlu0 %315
        %vm317 = vcmask 1039360
        %v318 = vsel %vm317, %v310, %v312
        %v319 = vsel %vm317, %v312, %v314
        %v320 = vsel %vm317, %v314, %v316
        %v322 = vcombine.low %v256, %v256
        %v324 = vunpack.c.l.s4 1983009808
        %v325 = vunpack.c.0.s8 %v324
        %v326 = vlaneseq
        %v327 = vshrl.u32 %v326, 7
        %v328 = vsub.s32 %v325, %v327
        %v329 = vrot.slane %v322, %v328
        %v331 = vunpack.c.l.s4 1983009808
        %v332 = vunpack.c.0.s8 %v331
        %v333 = vlaneseq
        %v334 = vshrl.u32 %v333, 7
        %v335 = vsub.s32 %v332, %v334
        %v336 = vrot.slane %v256, %v335
        %v337 = vcombine.low %v329, %v329
        %v338 = vcombine.low %v336, %v336
        %339 = vrot.lane.b32.xlu0 %v337, 127
        %v340 = vpop.permute.xlu0 %339
        %341 = vrot.lane.b32.xlu0 %v329, 127
        %v342 = vpop.permute.xlu0 %341
        %343 = vrot.lane.b32.xlu0 %v338, 127
        %v344 = vpop.permute.xlu0 %343
        %345 = vrot.lane.b32.xlu0 %v336, 127
        %v346 = vpop.permute.xlu0 %345
        %v347 = vsel %vm317, %v340, %v342
        %v348 = vsel %vm317, %v342, %v344
        %v349 = vsel %vm317, %v344, %v346
        %v350 = vcombine.high %v299, %v299
        %v351 = vcombine.high %v306, %v306
        %352 = vrot.lane.b32.xlu0 %v299, 126
        %v353 = vpop.permute.xlu0 %352
        %354 = vrot.lane.b32.xlu0 %v350, 126
        %v355 = vpop.permute.xlu0 %354
        %356 = vrot.lane.b32.xlu0 %v306, 126
        %v357 = vpop.permute.xlu0 %356
        %358 = vrot.lane.b32.xlu0 %v351, 126
        %v359 = vpop.permute.xlu0 %358
        %vm360 = vcmask 1031168
        %v361 = vsel %vm360, %v353, %v355
        %v362 = vsel %vm360, %v355, %v357
        %v363 = vsel %vm360, %v357, %v359
        %v364 = vcombine.high %v329, %v329
        %v365 = vcombine.high %v336, %v336
        %366 = vrot.lane.b32.xlu0 %v329, 126
        %v367 = vpop.permute.xlu0 %366
        %368 = vrot.lane.b32.xlu0 %v364, 126
        %v369 = vpop.permute.xlu0 %368
        %370 = vrot.lane.b32.xlu0 %v336, 126
        %v371 = vpop.permute.xlu0 %370
        %372 = vrot.lane.b32.xlu0 %v365, 126
        %v373 = vpop.permute.xlu0 %372
        %v374 = vsel %vm360, %v367, %v369
        %v375 = vsel %vm360, %v369, %v371
        %v376 = vsel %vm360, %v371, %v373
        %377 = vrot.lane.b32.xlu0 %v307, 104
        %v378 = vpop.permute.xlu0 %377
        %379 = vrot.lane.b32.xlu0 %v299, 104
        %v380 = vpop.permute.xlu0 %379
        %381 = vrot.lane.b32.xlu0 %v308, 104
        %v382 = vpop.permute.xlu0 %381
        %383 = vrot.lane.b32.xlu0 %v306, 104
        %v384 = vpop.permute.xlu0 %383
        %vm385 = vcmask 850944
        %v386 = vsel %vm385, %v378, %v380
        %v387 = vsel %vm385, %v380, %v382
        %v388 = vsel %vm385, %v382, %v384
        %389 = vrot.lane.b32.xlu0 %v337, 104
        %v390 = vpop.permute.xlu0 %389
        %391 = vrot.lane.b32.xlu0 %v329, 104
        %v392 = vpop.permute.xlu0 %391
        %393 = vrot.lane.b32.xlu0 %v338, 104
        %v394 = vpop.permute.xlu0 %393
        %395 = vrot.lane.b32.xlu0 %v336, 104
        %v396 = vpop.permute.xlu0 %395
        %v397 = vsel %vm385, %v390, %v392
        %v398 = vsel %vm385, %v392, %v394
        %v399 = vsel %vm385, %v394, %v396
        %400 = vrot.lane.b32.xlu0 %v299, 103
        %v401 = vpop.permute.xlu0 %400
        %402 = vrot.lane.b32.xlu0 %v350, 103
        %v403 = vpop.permute.xlu0 %402
        %404 = vrot.lane.b32.xlu0 %v306, 103
        %v405 = vpop.permute.xlu0 %404
        %406 = vrot.lane.b32.xlu0 %v351, 103
        %v407 = vpop.permute.xlu0 %406
        %vm408 = vcmask 842752
        %v409 = vsel %vm408, %v401, %v403
        %v410 = vsel %vm408, %v403, %v405
        %v411 = vsel %vm408, %v405, %v407
        %412 = vrot.lane.b32.xlu0 %v329, 103
        %v413 = vpop.permute.xlu0 %412
        %414 = vrot.lane.b32.xlu0 %v364, 103
        %v415 = vpop.permute.xlu0 %414
        %416 = vrot.lane.b32.xlu0 %v336, 103
        %v417 = vpop.permute.xlu0 %416
        %418 = vrot.lane.b32.xlu0 %v365, 103
        %v419 = vpop.permute.xlu0 %418
        %v420 = vsel %vm408, %v413, %v415
        %v421 = vsel %vm408, %v415, %v417
        %v422 = vsel %vm408, %v417, %v419
        %423 = vrot.lane.b32.xlu0 %v307, 102
        %v424 = vpop.permute.xlu0 %423
        %425 = vrot.lane.b32.xlu0 %v299, 102
        %v426 = vpop.permute.xlu0 %425
        %427 = vrot.lane.b32.xlu0 %v308, 102
        %v428 = vpop.permute.xlu0 %427
        %429 = vrot.lane.b32.xlu0 %v306, 102
        %v430 = vpop.permute.xlu0 %429
        %vm431 = vcmask 834560
        %v432 = vsel %vm431, %v424, %v426
        %v433 = vsel %vm431, %v426, %v428
        %v434 = vsel %vm431, %v428, %v430
        %435 = vrot.lane.b32.xlu0 %v337, 102
        %v436 = vpop.permute.xlu0 %435
        %437 = vrot.lane.b32.xlu0 %v329, 102
        %v438 = vpop.permute.xlu0 %437
        %439 = vrot.lane.b32.xlu0 %v338, 102
        %v440 = vpop.permute.xlu0 %439
        %441 = vrot.lane.b32.xlu0 %v336, 102
        %v442 = vpop.permute.xlu0 %441
        %v443 = vsel %vm431, %v436, %v438
        %v444 = vsel %vm431, %v438, %v440
        %v445 = vsel %vm431, %v440, %v442
        %446 = vrot.lane.b32.xlu0 %v299, 80
        %v447 = vpop.permute.xlu0 %446
        %448 = vrot.lane.b32.xlu0 %v350, 80
        %v449 = vpop.permute.xlu0 %448
        %450 = vrot.lane.b32.xlu0 %v306, 80
        %v451 = vpop.permute.xlu0 %450
        %452 = vrot.lane.b32.xlu0 %v351, 80
        %v453 = vpop.permute.xlu0 %452
        %vm454 = vcmask 654336
        %v455 = vsel %vm454, %v447, %v449
        %v456 = vsel %vm454, %v449, %v451
        %v457 = vsel %vm454, %v451, %v453
        %458 = vrot.lane.b32.xlu0 %v329, 80
        %v459 = vpop.permute.xlu0 %458
        %460 = vrot.lane.b32.xlu0 %v364, 80
        %v461 = vpop.permute.xlu0 %460
        %462 = vrot.lane.b32.xlu0 %v336, 80
        %v463 = vpop.permute.xlu0 %462
        %464 = vrot.lane.b32.xlu0 %v365, 80
        %v465 = vpop.permute.xlu0 %464
        %v466 = vsel %vm454, %v459, %v461
        %v467 = vsel %vm454, %v461, %v463
        %v468 = vsel %vm454, %v463, %v465
        %469 = vrot.lane.b32.xlu0 %v307, 79
        %v470 = vpop.permute.xlu0 %469
        %471 = vrot.lane.b32.xlu0 %v299, 79
        %v472 = vpop.permute.xlu0 %471
        %473 = vrot.lane.b32.xlu0 %v308, 79
        %v474 = vpop.permute.xlu0 %473
        %475 = vrot.lane.b32.xlu0 %v306, 79
        %v476 = vpop.permute.xlu0 %475
        %vm477 = vcmask 646144
        %v478 = vsel %vm477, %v470, %v472
        %v479 = vsel %vm477, %v472, %v474
        %v480 = vsel %vm477, %v474, %v476
        %481 = vrot.lane.b32.xlu0 %v337, 79
        %v482 = vpop.permute.xlu0 %481
        %483 = vrot.lane.b32.xlu0 %v329, 79
        %v484 = vpop.permute.xlu0 %483
        %485 = vrot.lane.b32.xlu0 %v338, 79
        %v486 = vpop.permute.xlu0 %485
        %487 = vrot.lane.b32.xlu0 %v336, 79
        %v488 = vpop.permute.xlu0 %487
        %v489 = vsel %vm477, %v482, %v484
        %v490 = vsel %vm477, %v484, %v486
        %v491 = vsel %vm477, %v486, %v488
        %vm492 = vcmask 1041408
        %v495 = vsel %vm492, %v265, %v282
        %v498 = vsel %vm492, %v273, %v290
        %v501 = vsel %vm492, %v272, %v289
        %vm502 = vcmask 1043456
        %v504 = vsel %vm502, %v495, %v318
        %v506 = vsel %vm502, %v498, %v319
        %v508 = vsel %vm502, %v501, %v320
        %vm509 = vcmask 1045504
        %v511 = vsel %vm509, %v504, %v347
        %v514 = vsel %vm509, %v506, %v348
        %v517 = vsel %vm509, %v508, %v349
        %v521 = vsel %vm492, %v361, %v374
        %v524 = vsel %vm492, %v362, %v375
        %v527 = vsel %vm492, %v363, %v376
        %v529 = vsel %vm502, %v521, %v386
        %v531 = vsel %vm502, %v524, %v387
        %v533 = vsel %vm502, %v527, %v388
        %v535 = vsel %vm509, %v529, %v397
        %v538 = vsel %vm509, %v531, %v398
        %v541 = vsel %vm509, %v533, %v399
        %v545 = vsel %vm492, %v409, %v420
        %v548 = vsel %vm492, %v410, %v421
        %v551 = vsel %vm492, %v411, %v422
        %v553 = vsel %vm502, %v545, %v432
        %v555 = vsel %vm502, %v548, %v433
        %v557 = vsel %vm502, %v551, %v434
        %v559 = vsel %vm509, %v553, %v443
        %v562 = vsel %vm509, %v555, %v444
        %v565 = vsel %vm509, %v557, %v445
        %v569 = vsel %vm492, %v455, %v466
        %v572 = vsel %vm492, %v456, %v467
        %v575 = vsel %vm492, %v457, %v468
        %v577 = vsel %vm502, %v569, %v478
        %v579 = vsel %vm502, %v572, %v479
        %v581 = vsel %vm502, %v575, %v480
        %v583 = vsel %vm509, %v577, %v489
        %v586 = vsel %vm509, %v579, %v490
        %v589 = vsel %vm509, %v581, %v491
        %v593 = vsel %vm492, %v299, %v329
        %v596 = vsel %vm492, %v350, %v364
        %v599 = vsel %vm492, %v306, %v336
        %v602 = vsel %vm492, %v351, %v365
        %607 = vrot.lane.b32.xlu0 %v593, 78
        %v608 = vpop.permute.xlu0 %607
        %609 = vrot.lane.b32.xlu0 %v596, 78
        %v610 = vpop.permute.xlu0 %609
        %611 = vrot.lane.b32.xlu0 %v599, 78
        %v612 = vpop.permute.xlu0 %611
        %613 = vrot.lane.b32.xlu0 %v602, 78
        %v614 = vpop.permute.xlu0 %613
        %vm615 = vcmask 637952
        %v616 = vsel %vm615, %v608, %v610
        %v617 = vsel %vm615, %v610, %v612
        %v618 = vsel %vm615, %v612, %v614
        %v619 = vld [vmem:[%s2] sm:$0xf]
        %vm620 = vcmask 588800
        %v622 = vsel %vm620, %v619, 0
        %v625 = vsel %vm502, %v616, 0
        %v628 = vsel %vm502, %v617, 0
        %v631 = vsel %vm502, %v618, 0
        %633 = vmatprep.subr.bf16.mxu0 %v514
        %634 = vmatpush1.bf16.msra.mxu0 %v511
        %635 = vmatprep.subr.bf16.mxu0 %v538
        %636 = vmatpush1.bf16.msra.mxu0 %v535
        %637 = vmatprep.subr.bf16.mxu0 %v562
        %638 = vmatpush1.bf16.msra.mxu0 %v559
        %639 = vmatprep.subr.bf16.mxu0 %v586
        %640 = vmatpush1.bf16.msra.mxu0 %v583
        %641 = vmatprep.subr.bf16.mxu0 %v628
        %642 = vmatpush1.bf16.msra.mxu0 %v625
        %643 = vmatprep.subr.bf16.mxu0 0
        %644 = vmatpush1.bf16.msra.mxu0 0
        %645 = vmatprep.subr.bf16.mxu0 0
        %646 = vmatpush1.bf16.msra.mxu0 0
        %647 = vmatprep.subr.bf16.mxu0 0
        %648 = vmatpush1.bf16.msra.mxu0 0
        %649 = vmatprep.subr.bf16.mxu0 0
        %650 = vmatpush1.bf16.msra.mxu0 0
        %651 = vmatprep.subr.bf16.mxu0 0
        %652 = vmatpush1.bf16.msra.mxu0 0
        %653 = vmatprep.subr.bf16.mxu0 0
        %654 = vmatpush1.bf16.msra.mxu0 0
        %655 = vmatprep.subr.bf16.mxu0 0
        %656 = vmatpush1.bf16.msra.mxu0 0
        %657 = vmatprep.subr.bf16.mxu0 0
        %658 = vmatpush1.bf16.msra.mxu0 0
        %659 = vmatprep.subr.bf16.mxu0 0
        %660 = vmatpush1.bf16.msra.mxu0 0
        %661 = vmatprep.subr.bf16.mxu0 0
        %662 = vmatpush1.bf16.msra.mxu0 0
        %663 = vmatprep.subr.bf16.mxu0 0
        %664 = vmatpush1.bf16.msra.mxu0 0
        %665 = vmatprep.mubr.bf16.mxu0 0
        %666 = vmatmul.mubr.bf16.gmra.mrb[0].mxu0 %v622
        %v667 = vpop.f32.mrb[0].mxu0
        %v668 = vadd.f32 0.0, %v667
        %v669 = vpop.f32.mrb[0].mxu0
        %v670 = vadd.f32 0.0, %v669
        %v671 = vpop.f32.mrb[0].mxu0
        %v672 = vpop.f32.mrb[0].mxu0
        %673 = vdwg.mxu0
        %674 = vmatprep.subr.bf16.mxu0 0
        %675 = vmatpush1.bf16.msra.mxu0 %v517
        %676 = vmatprep.subr.bf16.mxu0 0
        %677 = vmatpush1.bf16.msra.mxu0 %v541
        %678 = vmatprep.subr.bf16.mxu0 0
        %679 = vmatpush1.bf16.msra.mxu0 %v565
        %680 = vmatprep.subr.bf16.mxu0 0
        %681 = vmatpush1.bf16.msra.mxu0 %v589
        %682 = vmatprep.subr.bf16.mxu0 0
        %683 = vmatpush1.bf16.msra.mxu0 %v631
        %684 = vmatprep.subr.bf16.mxu0 0
        %685 = vmatpush1.bf16.msra.mxu0 0
        %686 = vmatprep.subr.bf16.mxu0 0
        %687 = vmatpush1.bf16.msra.mxu0 0
        %688 = vmatprep.subr.bf16.mxu0 0
        %689 = vmatpush1.bf16.msra.mxu0 0
        %690 = vmatprep.subr.bf16.mxu0 0
        %691 = vmatpush1.bf16.msra.mxu0 0
        %692 = vmatprep.subr.bf16.mxu0 0
        %693 = vmatpush1.bf16.msra.mxu0 0
        %694 = vmatprep.subr.bf16.mxu0 0
        %695 = vmatpush1.bf16.msra.mxu0 0
        %696 = vmatprep.subr.bf16.mxu0 0
        %697 = vmatpush1.bf16.msra.mxu0 0
        %698 = vmatprep.subr.bf16.mxu0 0
        %699 = vmatpush1.bf16.msra.mxu0 0
        %700 = vmatprep.subr.bf16.mxu0 0
        %701 = vmatpush1.bf16.msra.mxu0 0
        %702 = vmatprep.subr.bf16.mxu0 0
        %703 = vmatpush1.bf16.msra.mxu0 0
        %704 = vmatprep.subr.bf16.mxu0 0
        %705 = vmatpush1.bf16.msra.mxu0 0
        %706 = vmatprep.mubr.bf16.mxu0 0
        %707 = vmatmul.mubr.bf16.gmra.mrb[0].mxu0 %v622
        %v708 = vpop.f32.mrb[0].mxu0
        %v709 = vadd.f32 0.0, %v708
        %v710 = vpop.f32.mrb[0].mxu0
        %v711 = vpop.f32.mrb[0].mxu0
        %v712 = vpop.f32.mrb[0].mxu0
        %713 = vdwg.mxu0
        %v714 = vmax.f32 %v668, 0.0
        %v715 = vmax.f32 %v670, 0.0
        %v716 = vmax.f32 %v709, 0.0
        %v717 = vlaneseq
        %v718 = vand.u32 %v717, 127
        %v719 = vadd.s32 %v718, 128
        %v720 = vadd.s32 %v718, 256
        %vm721 = vcmp.lt.s32.totalorder %v718, 0
        %v722 = vsub.s32 0, %v718
        %v723 = vsel %vm721, %v722, %v718
        %v724 = vmul.u32.u64.compose %v723, 2863311531
        %v725 = vextract.low.u32 %v724
        %v726 = vextract.high.u32 %v724
        %v727 = vshrl.u32 %v726, 4
        %v728 = vmul.u32 %v727, 24
        %v729 = vsub.s32 %v723, %v728
        %v730 = vsub.s32 0, %v729
        %v731 = vsel %vm721, %v730, %v729
        %vm732 = vcmp.lt.s32.totalorder %v719, 0
        %v733 = vsub.s32 0, %v719
        %v734 = vsel %vm732, %v733, %v719
        %v735 = vmul.u32.u64.compose %v734, 2863311531
        %v736 = vextract.low.u32 %v735
        %v737 = vextract.high.u32 %v735
        %v738 = vshrl.u32 %v737, 4
        %v739 = vmul.u32 %v738, 24
        %v740 = vsub.s32 %v734, %v739
        %v741 = vsub.s32 0, %v740
        %v742 = vsel %vm732, %v741, %v740
        %vm743 = vcmp.lt.s32.totalorder %v720, 0
        %v744 = vsub.s32 0, %v720
        %v745 = vsel %vm743, %v744, %v720
        %v746 = vmul.u32.u64.compose %v745, 2863311531
        %v747 = vextract.low.u32 %v746
        %v748 = vextract.high.u32 %v746
        %v749 = vshrl.u32 %v748, 4
        %v750 = vmul.u32 %v749, 24
        %v751 = vsub.s32 %v745, %v750
        %v752 = vsub.s32 0, %v751
        %v753 = vsel %vm743, %v752, %v751
        %vm754 = vcmp.ne.s32.totalorder %v731, 0
        %vm755 = vcmp.ne.s32.totalorder %v742, 0
        %vm756 = vcmp.ne.s32.totalorder %v753, 0
        %vm757 = vcmp.lt.s32.totalorder %v731, 0
        %vm758 = vcmp.lt.s32.totalorder %v742, 0
        %vm759 = vcmp.lt.s32.totalorder %v753, 0
        %vm760 = vmand %vm757, %vm754
        %vm761 = vmand %vm758, %vm755
        %vm762 = vmand %vm759, %vm756
        %v763 = vadd.s32 %v731, 24
        %v764 = vadd.s32 %v742, 24
        %v765 = vadd.s32 %v753, 24
        %v766 = vsel %vm760, %v763, %v731
        %v767 = vsel %vm761, %v764, %v742
        %v768 = vsel %vm762, %v765, %v753
        %vm769 = vcmp.lt.s32.totalorder %v766, 16
        %vm770 = vcmp.lt.s32.totalorder %v767, 16
        %vm771 = vcmp.lt.s32.totalorder %v768, 16
        %v772 = vsel %vm769, %v714, 0.0
        %v773 = vsel %vm770, %v715, 0.0
        %v774 = vsel %vm771, %v716, 0.0
        %vm775 = vcmask 203776
        %776 = vst.msk [vmem:[#allocation2] sm:$0xff] %vm775, 0.0
        %780 = vrot.lane.b32.xlu0 %v772, 25
        %v781 = vpop.permute.xlu0 %780
        %782 = vrot.lane.b32.xlu0 %v773, 25
        %v783 = vpop.permute.xlu0 %782
        %784 = vrot.lane.b32.xlu0 %v774, 25
        %v785 = vpop.permute.xlu0 %784
        %v786 = vsel %vm775, %v781, %v783
        %v787 = vsel %vm775, %v783, %v785
        %vm792 = vcmask 1047752
        %793 = vst.msk [vmem:[#allocation2] sm:$0xff] %vm792, %v781
        %794 = vst [vmem:[#allocation2 + $0x8] sm:$0xff] %v786
        %795 = vst [vmem:[#allocation2 + $0x10] sm:$0xff] %v787
        %796 = vst.msk [vmem:[#allocation2 + $0x18] sm:$0xff] %vm775, %v785
        %vm797 = vcmask 589000
        %798 = vst.msk [vmem:[#allocation2 + $0x18] sm:$0xff] %vm797, 0.0
        %v799 = vld [vmem:[#allocation2] sm:$0xff]
        %v800 = vld [vmem:[#allocation2 + $0x8] sm:$0xff]
        %v801 = vld [vmem:[#allocation2 + $0x10] sm:$0xff]
        %v802 = vld [vmem:[#allocation2 + $0x18] sm:$0xff]
        %807 = vrot.lane.b32.xlu0 %v799, 127
        %v808 = vpop.permute.xlu0 %807
        %809 = vrot.lane.b32.xlu0 %v800, 127
        %v810 = vpop.permute.xlu0 %809
        %811 = vrot.lane.b32.xlu0 %v801, 127
        %v812 = vpop.permute.xlu0 %811
        %813 = vrot.lane.b32.xlu0 %v802, 127
        %v814 = vpop.permute.xlu0 %813
        %vm815 = vcmask 1039360
        %v816 = vsel %vm815, %v808, %v810
        %v817 = vsel %vm815, %v810, %v812
        %v818 = vsel %vm815, %v812, %v814
        %822 = vrot.lane.b32.xlu0 %v799, 126
        %v823 = vpop.permute.xlu0 %822
        %824 = vrot.lane.b32.xlu0 %v800, 126
        %v825 = vpop.permute.xlu0 %824
        %826 = vrot.lane.b32.xlu0 %v801, 126
        %v827 = vpop.permute.xlu0 %826
        %828 = vrot.lane.b32.xlu0 %v802, 126
        %v829 = vpop.permute.xlu0 %828
        %vm830 = vcmask 1031168
        %v831 = vsel %vm830, %v823, %v825
        %v832 = vsel %vm830, %v825, %v827
        %v833 = vsel %vm830, %v827, %v829
        %837 = vrot.lane.b32.xlu0 %v799, 104
        %v838 = vpop.permute.xlu0 %837
        %839 = vrot.lane.b32.xlu0 %v800, 104
        %v840 = vpop.permute.xlu0 %839
        %841 = vrot.lane.b32.xlu0 %v801, 104
        %v842 = vpop.permute.xlu0 %841
        %843 = vrot.lane.b32.xlu0 %v802, 104
        %v844 = vpop.permute.xlu0 %843
        %vm845 = vcmask 850944
        %v846 = vsel %vm845, %v838, %v840
        %v847 = vsel %vm845, %v840, %v842
        %v848 = vsel %vm845, %v842, %v844
        %852 = vrot.lane.b32.xlu0 %v799, 103
        %v853 = vpop.permute.xlu0 %852
        %854 = vrot.lane.b32.xlu0 %v800, 103
        %v855 = vpop.permute.xlu0 %854
        %856 = vrot.lane.b32.xlu0 %v801, 103
        %v857 = vpop.permute.xlu0 %856
        %858 = vrot.lane.b32.xlu0 %v802, 103
        %v859 = vpop.permute.xlu0 %858
        %vm860 = vcmask 842752
        %v861 = vsel %vm860, %v853, %v855
        %v862 = vsel %vm860, %v855, %v857
        %v863 = vsel %vm860, %v857, %v859
        %867 = vrot.lane.b32.xlu0 %v799, 102
        %v868 = vpop.permute.xlu0 %867
        %869 = vrot.lane.b32.xlu0 %v800, 102
        %v870 = vpop.permute.xlu0 %869
        %871 = vrot.lane.b32.xlu0 %v801, 102
        %v872 = vpop.permute.xlu0 %871
        %873 = vrot.lane.b32.xlu0 %v802, 102
        %v874 = vpop.permute.xlu0 %873
        %vm875 = vcmask 834560
        %v876 = vsel %vm875, %v868, %v870
        %v877 = vsel %vm875, %v870, %v872
        %v878 = vsel %vm875, %v872, %v874
        %882 = vrot.lane.b32.xlu0 %v799, 80
        %v883 = vpop.permute.xlu0 %882
        %884 = vrot.lane.b32.xlu0 %v800, 80
        %v885 = vpop.permute.xlu0 %884
        %886 = vrot.lane.b32.xlu0 %v801, 80
        %v887 = vpop.permute.xlu0 %886
        %888 = vrot.lane.b32.xlu0 %v802, 80
        %v889 = vpop.permute.xlu0 %888
        %vm890 = vcmask 654336
        %v891 = vsel %vm890, %v883, %v885
        %v892 = vsel %vm890, %v885, %v887
        %v893 = vsel %vm890, %v887, %v889
        %897 = vrot.lane.b32.xlu0 %v799, 79
        %v898 = vpop.permute.xlu0 %897
        %899 = vrot.lane.b32.xlu0 %v800, 79
        %v900 = vpop.permute.xlu0 %899
        %901 = vrot.lane.b32.xlu0 %v801, 79
        %v902 = vpop.permute.xlu0 %901
        %903 = vrot.lane.b32.xlu0 %v802, 79
        %v904 = vpop.permute.xlu0 %903
        %vm905 = vcmask 646144
        %v906 = vsel %vm905, %v898, %v900
        %v907 = vsel %vm905, %v900, %v902
        %v908 = vsel %vm905, %v902, %v904
        %912 = vrot.lane.b32.xlu0 %v799, 78
        %v913 = vpop.permute.xlu0 %912
        %914 = vrot.lane.b32.xlu0 %v800, 78
        %v915 = vpop.permute.xlu0 %914
        %916 = vrot.lane.b32.xlu0 %v801, 78
        %v917 = vpop.permute.xlu0 %916
        %918 = vrot.lane.b32.xlu0 %v802, 78
        %v919 = vpop.permute.xlu0 %918
        %vm920 = vcmask 637952
        %v921 = vsel %vm920, %v913, %v915
        %v922 = vsel %vm920, %v915, %v917
        %v923 = vsel %vm920, %v917, %v919
        %v927 = vld [vmem:[%s3] sm:$0xf]
        %v928 = vpack.c.bf16 %v816, %v799
        %v929 = vpack.c.bf16 %v817, %v800
        %v930 = vpack.c.bf16 %v818, %v801
        %v931 = vpack.c.bf16 %v846, %v831
        %v932 = vpack.c.bf16 %v847, %v832
        %v933 = vpack.c.bf16 %v848, %v833
        %v934 = vpack.c.bf16 %v876, %v861
        %v935 = vpack.c.bf16 %v877, %v862
        %v936 = vpack.c.bf16 %v878, %v863
        %v937 = vpack.c.bf16 %v906, %v891
        %v938 = vpack.c.bf16 %v907, %v892
        %v939 = vpack.c.bf16 %v908, %v893
        %v940 = vpack.c.bf16 %v921, %v921
        %v941 = vpack.c.bf16 %v922, %v922
        %v942 = vpack.c.bf16 %v923, %v923
        %v944 = vsel %vm620, %v927, 0
        %v947 = vsel %vm502, %v940, 0
        %v950 = vsel %vm502, %v941, 0
        %v953 = vsel %vm502, %v942, 0
        %955 = vmatprep.subr.bf16.mxu0 %v929
        %956 = vmatpush1.bf16.msra.mxu0 %v928
        %957 = vmatprep.subr.bf16.mxu0 %v932
        %958 = vmatpush1.bf16.msra.mxu0 %v931
        %959 = vmatprep.subr.bf16.mxu0 %v935
        %960 = vmatpush1.bf16.msra.mxu0 %v934
        %961 = vmatprep.subr.bf16.mxu0 %v938
        %962 = vmatpush1.bf16.msra.mxu0 %v937
        %963 = vmatprep.subr.bf16.mxu0 %v950
        %964 = vmatpush1.bf16.msra.mxu0 %v947
        %965 = vmatprep.subr.bf16.mxu0 0
        %966 = vmatpush1.bf16.msra.mxu0 0
        %967 = vmatprep.subr.bf16.mxu0 0
        %968 = vmatpush1.bf16.msra.mxu0 0
        %969 = vmatprep.subr.bf16.mxu0 0
        %970 = vmatpush1.bf16.msra.mxu0 0
        %971 = vmatprep.subr.bf16.mxu0 0
        %972 = vmatpush1.bf16.msra.mxu0 0
        %973 = vmatprep.subr.bf16.mxu0 0
        %974 = vmatpush1.bf16.msra.mxu0 0
        %975 = vmatprep.subr.bf16.mxu0 0
        %976 = vmatpush1.bf16.msra.mxu0 0
        %977 = vmatprep.subr.bf16.mxu0 0
        %978 = vmatpush1.bf16.msra.mxu0 0
        %979 = vmatprep.subr.bf16.mxu0 0
        %980 = vmatpush1.bf16.msra.mxu0 0
        %981 = vmatprep.subr.bf16.mxu0 0
        %982 = vmatpush1.bf16.msra.mxu0 0
        %983 = vmatprep.subr.bf16.mxu0 0
        %984 = vmatpush1.bf16.msra.mxu0 0
        %985 = vmatprep.subr.bf16.mxu0 0
        %986 = vmatpush1.bf16.msra.mxu0 0
        %987 = vmatprep.mubr.bf16.mxu0 0
        %988 = vmatmul.mubr.bf16.gmra.mrb[0].mxu0 %v944
        %v989 = vpop.f32.mrb[0].mxu0
        %v990 = vadd.f32 0.0, %v989
        %v991 = vpop.f32.mrb[0].mxu0
        %v992 = vadd.f32 0.0, %v991
        %v993 = vpop.f32.mrb[0].mxu0
        %v994 = vpop.f32.mrb[0].mxu0
        %995 = vdwg.mxu0
        %996 = vmatprep.subr.bf16.mxu0 0
        %997 = vmatpush1.bf16.msra.mxu0 %v930
        %998 = vmatprep.subr.bf16.mxu0 0
        %999 = vmatpush1.bf16.msra.mxu0 %v933
        %1000 = vmatprep.subr.bf16.mxu0 0
        %1001 = vmatpush1.bf16.msra.mxu0 %v936
        %1002 = vmatprep.subr.bf16.mxu0 0
        %1003 = vmatpush1.bf16.msra.mxu0 %v939
        %1004 = vmatprep.subr.bf16.mxu0 0
        %1005 = vmatpush1.bf16.msra.mxu0 %v953
        %1006 = vmatprep.subr.bf16.mxu0 0
        %1007 = vmatpush1.bf16.msra.mxu0 0
        %1008 = vmatprep.subr.bf16.mxu0 0
        %1009 = vmatpush1.bf16.msra.mxu0 0
        %1010 = vmatprep.subr.bf16.mxu0 0
        %1011 = vmatpush1.bf16.msra.mxu0 0
        %1012 = vmatprep.subr.bf16.mxu0 0
        %1013 = vmatpush1.bf16.msra.mxu0 0
        %1014 = vmatprep.subr.bf16.mxu0 0
        %1015 = vmatpush1.bf16.msra.mxu0 0
        %1016 = vmatprep.subr.bf16.mxu0 0
        %1017 = vmatpush1.bf16.msra.mxu0 0
        %1018 = vmatprep.subr.bf16.mxu0 0
        %1019 = vmatpush1.bf16.msra.mxu0 0
        %1020 = vmatprep.subr.bf16.mxu0 0
        %1021 = vmatpush1.bf16.msra.mxu0 0
        %1022 = vmatprep.subr.bf16.mxu0 0
        %1023 = vmatpush1.bf16.msra.mxu0 0
        %1024 = vmatprep.subr.bf16.mxu0 0
        %1025 = vmatpush1.bf16.msra.mxu0 0
        %1026 = vmatprep.subr.bf16.mxu0 0
        %1027 = vmatpush1.bf16.msra.mxu0 0
        %1028 = vmatprep.mubr.bf16.mxu0 0
        %1029 = vmatmul.mubr.bf16.gmra.mrb[0].mxu0 %v944
        %v1030 = vpop.f32.mrb[0].mxu0
        %v1031 = vadd.f32 0.0, %v1030
        %v1032 = vpop.f32.mrb[0].mxu0
        %v1033 = vpop.f32.mrb[0].mxu0
        %v1034 = vpop.f32.mrb[0].mxu0
        %1035 = vdwg.mxu0
        %v1036 = vmax.f32 %v990, -2.0
        %v1037 = vmax.f32 %v992, -2.0
        %v1038 = vmax.f32 %v1031, -2.0
        %v1039 = vmin.f32 %v1036, 2.0
        %v1040 = vmin.f32 %v1037, 2.0
        %v1041 = vmin.f32 %v1038, 2.0
        %1042 = vst [vmem:[%s251] sm:$0xff] %v1039
        %1043 = vst [vmem:[%s251 + $0x8] sm:$0xff] %v1040
        %1044 = vst [vmem:[%s251 + $0x10] sm:$0xff] %v1041
        %s1045 = sand.u32 %s126, 1
        %s1046 = scalar_lea.sflag [#allocation5], %s1045
        %s1047 = sand.u32 %s126, 1
        %s1048 = smul.addr %s1047, 24
        %s1049 = scalar_lea.vmem [#allocation8], %s1048
        // Predicated region
        $region45: #{tpu_custom_call.1} parent=35 // pred_check
          %p1050 = pneg %p136
        $region46: #{tpu_custom_call.1} parent=35 // pred_check_branch
          %1052 = sbr.rel (%p1050) target = $region48
        $region47: #{tpu_custom_call.1} parent=35 // pred_region
          %s1054 = ssub.s32 384, 384
          %1055 = vsyncadd %s1046, %s1054
          %s1056 = smul.addr %s24, 3
          %s1057 = smul.addr %s1056, 128
          %s1058 = scalar_lea.hbm %s4, %s1057
          %s1060 = sshll.u32 %s1049, 4
          %s1061 = int_to_ptr.vmem [resolvable:$true] %s1060
          %1063 = dma.vmem_to_hbm [thread:$0]  %s1061, 384, %s1058, %s1046
        $region48: #{tpu_custom_call.1} parent=35 // pred_fallthru
          _
      $region36: #{tpu_custom_call.1} parent=5 // pred_fallthru
        _
      %p1064 = scmp.le.s32.totalorder 2, %s19
      // Predicated region
      $region49: #{tpu_custom_call.1} parent=5 // pred_check
        %p1065 = pneg %p1064
      $region50: #{tpu_custom_call.1} parent=5 // pred_check_branch
        %1067 = sbr.rel (%p1065) target = $region52
      $region51: #{tpu_custom_call.1} parent=5 // pred_region
        %s1068 = ssub.s32 %s19, 2
        // Predicated region
        $region53: #{tpu_custom_call.1} parent=51 // pred_check
          %p1069 = pneg %p142
        $region54: #{tpu_custom_call.1} parent=51 // pred_check_branch
          %1071 = sbr.rel (%p1069) target = $region56
        $region55: #{tpu_custom_call.1} parent=51 // pred_region
          %s1072 = sand.u32 %s127, 1
          %s1073 = scalar_lea.sflag [#allocation5], %s1072
          %s1074 = sand.u32 %s127, 1
          %s1075 = smul.addr %s1074, 24
          %s1076 = scalar_lea.vmem [#allocation8], %s1075
          %1077 = dma.done %s1073, 384
        $region56: #{tpu_custom_call.1} parent=51 // pred_fallthru
          _
      $region52: #{tpu_custom_call.1} parent=5 // pred_fallthru
        _
    $region6: #{tpu_custom_call.1} parent=1 // loop_footer
      %s23 = sadd.s32 1, %s19
    $region7: #{tpu_custom_call.1} parent=1 // loop_footer_branch
      %18 = sbr.rel target = $region3
    $region8: #{tpu_custom_call.1} parent=1 // loop_exit
      _
    %1078 = vsyncpa [#allocation4], 1
    %s1079 = scalar_lea.sflag [#allocation4], 1
    %1080 = vsyncpa %s1079, 1
    %1081 = vsyncpa [#allocation7], 1
    %s1082 = scalar_lea.sflag [#allocation7], 1
    %1083 = vsyncpa %s1082, 1
    %1084 = vsyncpa [#allocation5], 1
    %s1085 = scalar_lea.sflag [#allocation5], 1
    %1086 = vsyncpa %s1085, 1

</llo_original>
